<compile_context>
chip_gen: v7x
topology: tpu7x:2x2x1
jax: 0.10.0
libtpu: 0.0.40
codegen_flags: <defaults>
</compile_context>

<pallas_src>
import functools

import jax
import jax.numpy as jnp
from jax import lax
from jax.experimental import pallas as pl
from jax.experimental.pallas import tpu as pltpu

LANE = 128
TILE_BYTES = 2 * 1024 * 1024        # target bytes per stream tile (~85%+ of HBM roofline)
VMEM_LIMIT_BYTES = 32 * 1024 * 1024 # 4 streams x 2 bufs x <=2 MiB + <=2 MiB scratch + slack
SMALL_INPUT_BYTES = 256 * 1024      # below this, skip Pallas (launch overhead dominates)


def _round_up(x, m):
    return (x + m - 1) // m * m


def _sublane_multiple(dtype):
    # f32 -> 8 rows, bf16/f16 -> 16, int8/fp8 -> 32 (sub-32-bit packs along sublanes).
    return max(8, 32 // jnp.dtype(dtype).itemsize)


def _num_tensorcores():
    """2 on multi-TensorCore chips (v4 / v5p / v7x), else 1. NCORES=2 is always
    correct (just a serial outer loop on single-TC chips), so detection errors
    are only a (small) perf issue, never a correctness one."""
    try:
        dev = jax.devices()[0]
        if dev.platform != "tpu":
            return 1
        kind = dev.device_kind.lower()
        return 2 if ("v7" in kind or "v5p" in kind or "v4" in kind) else 1
    except Exception:
        return 1


def _prep(x, sub_m):
    """Ravel to 1-D (free for contiguous arrays); pad only the ragged tail up to
    a dtype-aware sub_m*LANE boundary; reshape to (rows, LANE)."""
    x = jnp.ravel(x)
    n = max(x.size, 1)
    n_pad = _round_up(n, sub_m * LANE)
    if n_pad != x.size:
        x = jnp.pad(x, (0, n_pad - x.size))
    rows = n_pad // LANE
    return x.reshape(rows, LANE), rows


def _attr_max_kernel(alpha_ref, am_ref, attr_ref, n2_ref, on2_ref, out_ref, acc_ref,
                     *, tm, tiles_per_core, rows1, rows2, last1, last2):
    c = pl.program_id(0)           # parallel (core) axis
    i = pl.program_id(1)           # arbitrary (reduction) axis
    t = c * tiles_per_core + i     # global (unclamped) tile id

    @pl.when(i == 0)
    def _():
        acc_ref[...] = jnp.zeros_like(acc_ref)

    # ---- term 1: vis_am * ori_img_attr --------------------------------------
    @pl.when(t < last1)            # full in-bounds tile: unmasked fast path
    def _():
        acc_ref[...] += (am_ref[...].astype(jnp.float32) *
                         attr_ref[...].astype(jnp.float32))

    @pl.when(t == last1)           # tail tile: mask ragged / OOB rows only here
    def _():
        row = t * tm + lax.broadcasted_iota(jnp.int32, (tm, LANE), 0)
        a = am_ref[...].astype(jnp.float32) * attr_ref[...].astype(jnp.float32)
        acc_ref[...] += jnp.where(row < rows1, a, 0.0)
    # t > last1: clamped duplicate tile -> skipped entirely.

    # ---- term 2: attn_alpha * vis_norm2 * ori_img_norm2 ----------------------
    alpha = alpha_ref[0]

    @pl.when(t < last2)
    def _():
        acc_ref[...] += alpha * (n2_ref[...].astype(jnp.float32) *
                                 on2_ref[...].astype(jnp.float32))

    @pl.when(t == last2)
    def _():
        row = t * tm + lax.broadcasted_iota(jnp.int32, (tm, LANE), 0)
        b = n2_ref[...].astype(jnp.float32) * on2_ref[...].astype(jnp.float32)
        acc_ref[...] += alpha * jnp.where(row < rows2, b, 0.0)

    # ---- one-time epilogue: fold (tm, 128) scratch to a tiny (8, 128) block --
    @pl.when(i == tiles_per_core - 1)
    def _():
        out_ref[...] = jnp.sum(acc_ref[...].reshape(tm // 8, 8, LANE), axis=0)


def attr_maximization_loss(vis_am, vis_norm2, ori_img_attr, ori_img_norm2,
                           attn_alpha, *, force_pallas=False):
    vis_am = jnp.asarray(vis_am)
    ori_img_attr = jnp.asarray(ori_img_attr)
    vis_norm2 = jnp.asarray(vis_norm2)
    ori_img_norm2 = jnp.asarray(ori_img_norm2)
    alpha_f32 = jnp.asarray(attn_alpha, jnp.float32)

    streams = (vis_am, ori_img_attr, vis_norm2, ori_img_norm2)

    # Small-input fallback: XLA's fused reduce is already at roofline for tiny maps.
    max_stream_bytes = max(x.size * x.dtype.itemsize for x in streams)
    if not force_pallas and max_stream_bytes < SMALL_INPUT_BYTES:
        return (jnp.sum(vis_am.astype(jnp.float32) * ori_img_attr.astype(jnp.float32))
                + jnp.sum(vis_norm2.astype(jnp.float32) * ori_img_norm2.astype(jnp.float32))
                * alpha_f32)

    # Dtype-aware sublane rounding shared by all four streams.
    sub_m = max(_sublane_multiple(x.dtype) for x in streams)

    am, rows1 = _prep(vis_am, sub_m)
    attr, rows1b = _prep(ori_img_attr, sub_m)
    v2, rows2 = _prep(vis_norm2, sub_m)
    o2, rows2b = _prep(ori_img_norm2, sub_m)
    assert rows1 == rows1b and rows2 == rows2b, "paired inputs must have equal sizes"

    # Tile height: target ~TILE_BYTES per stream tile, never taller than either
    # stream (so no block exceeds its array), rounded to the sublane multiple.
    max_itemsize = max(x.dtype.itemsize for x in (am, attr, v2, o2))
    tm_cap = max(sub_m, (TILE_BYTES // (LANE * max_itemsize)) // sub_m * sub_m)
    tm = min(tm_cap, rows1, rows2)

    rows_max = max(rows1, rows2)
    ncores = _num_tensorcores()
    total_tiles = pl.cdiv(rows_max, tm)
    tiles_per_core = pl.cdiv(total_tiles, ncores)

    last1 = pl.cdiv(rows1, tm) - 1
    last2 = pl.cdiv(rows2, tm) - 1

    def tile_map(last_blk):
        def imap(c, i):
            t = c * tiles_per_core + i
            return (jnp.minimum(t, last_blk), 0)   # clamp OOB tile ids (skipped in-kernel)
        return imap

    kernel = functools.partial(
        _attr_max_kernel,
        tm=tm, tiles_per_core=tiles_per_core,
        rows1=rows1, rows2=rows2, last1=last1, last2=last2)

    out_rows = ncores * 8
    cost = pl.CostEstimate(
        flops=2 * (vis_am.size + vis_norm2.size) + vis_norm2.size,
        transcendentals=0,
        bytes_accessed=int(am.nbytes + attr.nbytes + v2.nbytes + o2.nbytes
                           + out_rows * LANE * 4),
    )

    partials = pl.pallas_call(
        kernel,
        out_shape=jax.ShapeDtypeStruct((out_rows, LANE), jnp.float32),
        grid=(ncores, tiles_per_core),
        in_specs=[
            pl.BlockSpec(memory_space=pltpu.SMEM),       # attn_alpha scalar
            pl.BlockSpec((tm, LANE), tile_map(last1)),   # vis_am
            pl.BlockSpec((tm, LANE), tile_map(last1)),   # ori_img_attr
            pl.BlockSpec((tm, LANE), tile_map(last2)),   # vis_norm2
            pl.BlockSpec((tm, LANE), tile_map(last2)),   # ori_img_norm2
        ],
        out_specs=pl.BlockSpec((8, LANE), lambda c, i: (c, 0)),
        scratch_shapes=[pltpu.VMEM((tm, LANE), jnp.float32)],
        compiler_params=pltpu.CompilerParams(
            dimension_semantics=("parallel", "arbitrary"),
            vmem_limit_bytes=VMEM_LIMIT_BYTES),
        cost_estimate=cost,
    )(alpha_f32.reshape(1), am, attr, v2, o2)

    # Tiny final fold of the per-core (8, 128) partial blocks.
    return jnp.sum(partials)


if __name__ == "__main__":
    key = jax.random.PRNGKey(0)
    k1, k2, k3, k4 = jax.random.split(key, 4)

    # Small NCHW-style attribution maps (batch=2, channels=4, spatial=16x16).
    shape = (2, 4, 16, 16)
    vis_am = jax.random.normal(k1, shape, dtype=jnp.float32)
    ori_img_attr = jax.random.normal(k2, shape, dtype=jnp.float32)
    vis_norm2 = jax.random.normal(k3, shape, dtype=jnp.float32)
    ori_img_norm2 = jax.random.normal(k4, shape, dtype=jnp.float32)
    attn_alpha = 0.5

    # Force the Pallas path so the kernel itself is exercised at demo size.
    loss = attr_maximization_loss(vis_am, vis_norm2, ori_img_attr, ori_img_norm2,
                                  attn_alpha, force_pallas=True)
    loss = jax.block_until_ready(loss)

    # Pure-JAX reference (same semantics as the PyTorch module).
    ref = (jnp.sum(vis_am * ori_img_attr)
           + jnp.sum(vis_norm2 * ori_img_norm2) * attn_alpha)
    assert jnp.allclose(loss, ref, rtol=1e-5, atol=1e-5), (loss, ref)

    # Default path (small-input fallback) must agree too.
    loss_auto = attr_maximization_loss(vis_am, vis_norm2, ori_img_attr, ori_img_norm2,
                                       attn_alpha)
    loss_auto = jax.block_until_ready(loss_auto)
    assert jnp.allclose(loss_auto, ref, rtol=1e-5, atol=1e-5), (loss_auto, ref)

    print("KERNEL_OK")
</pallas_src>

<mosaic_0001>
module attributes {stable_mosaic.version = 11 : i64} {
  func.func @_attr_max_kernel(%arg0: i32, %arg1: i32, %arg2: memref<1xf32, #tpu.memory_space<smem>>, %arg3: memref<16x128xf32, #tpu.memory_space<vmem>>, %arg4: memref<16x128xf32, #tpu.memory_space<vmem>>, %arg5: memref<16x128xf32, #tpu.memory_space<vmem>>, %arg6: memref<16x128xf32, #tpu.memory_space<vmem>>, %arg7: memref<8x128xf32, #tpu.memory_space<vmem>>, %arg8: memref<16x128xf32, #tpu.memory_space<vmem>>) attributes {dimension_semantics = [#tpu.dimension_semantics<parallel>, #tpu.dimension_semantics<arbitrary>], iteration_bounds = array<i64: 1, 1>, scalar_prefetch = 0 : i64, scratch_operands = 1 : i64, tpu.core_type = #tpu.core_type<tc>, window_params = [{transform_indices = @transform_0, window_bounds = array<i64: 1>}, {transform_indices = @transform_1, window_bounds = array<i64: 16, 128>}, {transform_indices = @transform_2, window_bounds = array<i64: 16, 128>}, {transform_indices = @transform_3, window_bounds = array<i64: 16, 128>}, {transform_indices = @transform_4, window_bounds = array<i64: 16, 128>}, {transform_indices = @transform_5, window_bounds = array<i64: 8, 128>}]} {
    %c1_i32 = arith.constant 1 : i32
    %0 = arith.muli %arg0, %c1_i32 : i32
    %1 = arith.addi %0, %arg1 : i32
    %c0_i32 = arith.constant 0 : i32
    %2 = arith.cmpi eq, %arg1, %c0_i32 : i32
    %3 = arith.extui %2 : i1 to i32
    %c0_i32_0 = arith.constant 0 : i32
    %4 = arith.cmpi ne, %3, %c0_i32_0 : i32
    scf.if %4 {
      %cst = arith.constant 0.000000e+00 : f32
      %21 = vector.broadcast %cst : f32 to vector<16x128xf32>
      %c0_11 = arith.constant 0 : index
      %c0_12 = arith.constant 0 : index
      %22 = vector.load %arg8[%c0_11, %c0_12] : memref<16x128xf32, #tpu.memory_space<vmem>>, vector<16x128xf32>
      tpu.vector_store %arg8[%c0_11, %c0_12], %21 {strides = array<i32>} : memref<16x128xf32, #tpu.memory_space<vmem>>, vector<16x128xf32>,
    } else {
    }
    %c0_i32_1 = arith.constant 0 : i32
    %5 = arith.cmpi slt, %1, %c0_i32_1 : i32
    %6 = arith.extui %5 : i1 to i32
    %c0_i32_2 = arith.constant 0 : i32
    %7 = arith.cmpi ne, %6, %c0_i32_2 : i32
    scf.if %7 {
      %c0_11 = arith.constant 0 : index
      %c0_12 = arith.constant 0 : index
      %21 = vector.load %arg8[%c0_11, %c0_12] : memref<16x128xf32, #tpu.memory_space<vmem>>, vector<16x128xf32>
      %c0_13 = arith.constant 0 : index
      %c0_14 = arith.constant 0 : index
      %22 = vector.load %arg3[%c0_13, %c0_14] : memref<16x128xf32, #tpu.memory_space<vmem>>, vector<16x128xf32>
      %c0_15 = arith.constant 0 : index
      %c0_16 = arith.constant 0 : index
      %23 = vector.load %arg4[%c0_15, %c0_16] : memref<16x128xf32, #tpu.memory_space<vmem>>, vector<16x128xf32>
      %24 = arith.mulf %22, %23 : vector<16x128xf32>
      %25 = arith.addf %21, %24 : vector<16x128xf32>
      %c0_17 = arith.constant 0 : index
      %c0_18 = arith.constant 0 : index
      %26 = vector.load %arg8[%c0_17, %c0_18] : memref<16x128xf32, #tpu.memory_space<vmem>>, vector<16x128xf32>
      tpu.vector_store %arg8[%c0_17, %c0_18], %25 {strides = array<i32>} : memref<16x128xf32, #tpu.memory_space<vmem>>, vector<16x128xf32>,
    } else {
    }
    %c0_i32_3 = arith.constant 0 : i32
    %8 = arith.cmpi eq, %1, %c0_i32_3 : i32
    %9 = arith.extui %8 : i1 to i32
    %c0_i32_4 = arith.constant 0 : i32
    %10 = arith.cmpi ne, %9, %c0_i32_4 : i32
    scf.if %10 {
      %c16_i32 = arith.constant 16 : i32
      %21 = arith.muli %1, %c16_i32 : i32
      %22 = tpu.iota {dimensions = array<i32: 0>} : vector<16x128xi32>
      %23 = vector.broadcast %21 : i32 to vector<16x128xi32>
      %24 = arith.addi %23, %22 : vector<16x128xi32>
      %c0_11 = arith.constant 0 : index
      %c0_12 = arith.constant 0 : index
      %25 = vector.load %arg3[%c0_11, %c0_12] : memref<16x128xf32, #tpu.memory_space<vmem>>, vector<16x128xf32>
      %c0_13 = arith.constant 0 : index
      %c0_14 = arith.constant 0 : index
      %26 = vector.load %arg4[%c0_13, %c0_14] : memref<16x128xf32, #tpu.memory_space<vmem>>, vector<16x128xf32>
      %27 = arith.mulf %25, %26 : vector<16x128xf32>
      %c0_15 = arith.constant 0 : index
      %c0_16 = arith.constant 0 : index
      %28 = vector.load %arg8[%c0_15, %c0_16] : memref<16x128xf32, #tpu.memory_space<vmem>>, vector<16x128xf32>
      %c16_i32_17 = arith.constant 16 : i32
      %29 = vector.broadcast %c16_i32_17 : i32 to vector<16x128xi32>
      %30 = arith.cmpi slt, %24, %29 : vector<16x128xi32>
      %cst = arith.constant 0.000000e+00 : f32
      %31 = vector.broadcast %cst : f32 to vector<16x128xf32>
      %32 = arith.select %30, %27, %31 : vector<16x128xi1>, vector<16x128xf32>
      %33 = arith.addf %28, %32 : vector<16x128xf32>
      %c0_18 = arith.constant 0 : index
      %c0_19 = arith.constant 0 : index
      %34 = vector.load %arg8[%c0_18, %c0_19] : memref<16x128xf32, #tpu.memory_space<vmem>>, vector<16x128xf32>
      tpu.vector_store %arg8[%c0_18, %c0_19], %33 {strides = array<i32>} : memref<16x128xf32, #tpu.memory_space<vmem>>, vector<16x128xf32>,
    } else {
    }
    %c0 = arith.constant 0 : index
    %11 = memref.load %arg2[%c0] : memref<1xf32, #tpu.memory_space<smem>>
    %c0_i32_5 = arith.constant 0 : i32
    %12 = arith.cmpi slt, %1, %c0_i32_5 : i32
    %13 = arith.extui %12 : i1 to i32
    %c0_i32_6 = arith.constant 0 : i32
    %14 = arith.cmpi ne, %13, %c0_i32_6 : i32
    scf.if %14 {
      %c0_11 = arith.constant 0 : index
      %c0_12 = arith.constant 0 : index
      %21 = vector.load %arg8[%c0_11, %c0_12] : memref<16x128xf32, #tpu.memory_space<vmem>>, vector<16x128xf32>
      %c0_13 = arith.constant 0 : index
      %c0_14 = arith.constant 0 : index
      %22 = vector.load %arg5[%c0_13, %c0_14] : memref<16x128xf32, #tpu.memory_space<vmem>>, vector<16x128xf32>
      %c0_15 = arith.constant 0 : index
      %c0_16 = arith.constant 0 : index
      %23 = vector.load %arg6[%c0_15, %c0_16] : memref<16x128xf32, #tpu.memory_space<vmem>>, vector<16x128xf32>
      %24 = arith.mulf %22, %23 : vector<16x128xf32>
      %25 = vector.broadcast %11 : f32 to vector<16x128xf32>
      %26 = arith.mulf %25, %24 : vector<16x128xf32>
      %27 = arith.addf %21, %26 : vector<16x128xf32>
      %c0_17 = arith.constant 0 : index
      %c0_18 = arith.constant 0 : index
      %28 = vector.load %arg8[%c0_17, %c0_18] : memref<16x128xf32, #tpu.memory_space<vmem>>, vector<16x128xf32>
      tpu.vector_store %arg8[%c0_17, %c0_18], %27 {strides = array<i32>} : memref<16x128xf32, #tpu.memory_space<vmem>>, vector<16x128xf32>,
    } else {
    }
    %c0_i32_7 = arith.constant 0 : i32
    %15 = arith.cmpi eq, %1, %c0_i32_7 : i32
    %16 = arith.extui %15 : i1 to i32
    %c0_i32_8 = arith.constant 0 : i32
    %17 = arith.cmpi ne, %16, %c0_i32_8 : i32
    scf.if %17 {
      %c16_i32 = arith.constant 16 : i32
      %21 = arith.muli %1, %c16_i32 : i32
      %22 = tpu.iota {dimensions = array<i32: 0>} : vector<16x128xi32>
      %23 = vector.broadcast %21 : i32 to vector<16x128xi32>
      %24 = arith.addi %23, %22 : vector<16x128xi32>
      %c0_11 = arith.constant 0 : index
      %c0_12 = arith.constant 0 : index
      %25 = vector.load %arg5[%c0_11, %c0_12] : memref<16x128xf32, #tpu.memory_space<vmem>>, vector<16x128xf32>
      %c0_13 = arith.constant 0 : index
      %c0_14 = arith.constant 0 : index
      %26 = vector.load %arg6[%c0_13, %c0_14] : memref<16x128xf32, #tpu.memory_space<vmem>>, vector<16x128xf32>
      %27 = arith.mulf %25, %26 : vector<16x128xf32>
      %c0_15 = arith.constant 0 : index
      %c0_16 = arith.constant 0 : index
      %28 = vector.load %arg8[%c0_15, %c0_16] : memref<16x128xf32, #tpu.memory_space<vmem>>, vector<16x128xf32>
      %c16_i32_17 = arith.constant 16 : i32
      %29 = vector.broadcast %c16_i32_17 : i32 to vector<16x128xi32>
      %30 = arith.cmpi slt, %24, %29 : vector<16x128xi32>
      %cst = arith.constant 0.000000e+00 : f32
      %31 = vector.broadcast %cst : f32 to vector<16x128xf32>
      %32 = arith.select %30, %27, %31 : vector<16x128xi1>, vector<16x128xf32>
      %33 = vector.broadcast %11 : f32 to vector<16x128xf32>
      %34 = arith.mulf %33, %32 : vector<16x128xf32>
      %35 = arith.addf %28, %34 : vector<16x128xf32>
      %c0_18 = arith.constant 0 : index
      %c0_19 = arith.constant 0 : index
      %36 = vector.load %arg8[%c0_18, %c0_19] : memref<16x128xf32, #tpu.memory_space<vmem>>, vector<16x128xf32>
      tpu.vector_store %arg8[%c0_18, %c0_19], %35 {strides = array<i32>} : memref<16x128xf32, #tpu.memory_space<vmem>>, vector<16x128xf32>,
    } else {
    }
    %c0_i32_9 = arith.constant 0 : i32
    %18 = arith.cmpi eq, %arg1, %c0_i32_9 : i32
    %19 = arith.extui %18 : i1 to i32
    %c0_i32_10 = arith.constant 0 : i32
    %20 = arith.cmpi ne, %19, %c0_i32_10 : i32
    scf.if %20 {
      %c0_11 = arith.constant 0 : index
      %c0_12 = arith.constant 0 : index
      %21 = vector.load %arg8[%c0_11, %c0_12] : memref<16x128xf32, #tpu.memory_space<vmem>>, vector<16x128xf32>
      %22 = vector.shape_cast %21 : vector<16x128xf32> to vector<2x8x128xf32>
      %cst = arith.constant dense<0.000000e+00> : vector<8x128xf32>
      %23 = vector.multi_reduction <add>, %22, %cst [0] : vector<2x8x128xf32> to vector<8x128xf32>
      %c0_13 = arith.constant 0 : index
      %c0_14 = arith.constant 0 : index
      %24 = vector.load %arg7[%c0_13, %c0_14] : memref<8x128xf32, #tpu.memory_space<vmem>>, vector<8x128xf32>
      tpu.vector_store %arg7[%c0_13, %c0_14], %23 {strides = array<i32>} : memref<8x128xf32, #tpu.memory_space<vmem>>, vector<8x128xf32>,
    } else {
    }
    return
  }
  func.func @transform_0(%arg0: i32, %arg1: i32) -> i32 {
    %c0_i32 = arith.constant 0 : i32
    %c0_i32_0 = arith.constant 0 : i32
    return %c0_i32 : i32
  }
  func.func @transform_1(%arg0: i32, %arg1: i32) -> (i32, i32) {
    %c1_i32 = arith.constant 1 : i32
    %0 = arith.muli %arg0, %c1_i32 : i32
    %1 = arith.addi %0, %arg1 : i32
    %c0_i32 = arith.constant 0 : i32
    %2 = arith.minsi %1, %c0_i32 : i32
    %c0_i32_0 = arith.constant 0 : i32
    %c0_i32_1 = arith.constant 0 : i32
    return %2, %c0_i32_0 : i32, i32
  }
  func.func @transform_2(%arg0: i32, %arg1: i32) -> (i32, i32) {
    %c1_i32 = arith.constant 1 : i32
    %0 = arith.muli %arg0, %c1_i32 : i32
    %1 = arith.addi %0, %arg1 : i32
    %c0_i32 = arith.constant 0 : i32
    %2 = arith.minsi %1, %c0_i32 : i32
    %c0_i32_0 = arith.constant 0 : i32
    %c0_i32_1 = arith.constant 0 : i32
    return %2, %c0_i32_0 : i32, i32
  }
  func.func @transform_3(%arg0: i32, %arg1: i32) -> (i32, i32) {
    %c1_i32 = arith.constant 1 : i32
    %0 = arith.muli %arg0, %c1_i32 : i32
    %1 = arith.addi %0, %arg1 : i32
    %c0_i32 = arith.constant 0 : i32
    %2 = arith.minsi %1, %c0_i32 : i32
    %c0_i32_0 = arith.constant 0 : i32
    %c0_i32_1 = arith.constant 0 : i32
    return %2, %c0_i32_0 : i32, i32
  }
  func.func @transform_4(%arg0: i32, %arg1: i32) -> (i32, i32) {
    %c1_i32 = arith.constant 1 : i32
    %0 = arith.muli %arg0, %c1_i32 : i32
    %1 = arith.addi %0, %arg1 : i32
    %c0_i32 = arith.constant 0 : i32
    %2 = arith.minsi %1, %c0_i32 : i32
    %c0_i32_0 = arith.constant 0 : i32
    %c0_i32_1 = arith.constant 0 : i32
    return %2, %c0_i32_0 : i32, i32
  }
  func.func @transform_5(%arg0: i32, %arg1: i32) -> (i32, i32) {
    %c0_i32 = arith.constant 0 : i32
    %c0_i32_0 = arith.constant 0 : i32
    return %arg0, %c0_i32 : i32, i32
  }
}

</mosaic_0001>

<llo_original>
// kernel: tpu_custom_call.1
$region0: #{tpu_custom_call.1}
  #allocation0 [shape = 'u32[]', space=smem, size = 0x4, offset = 0x4, fixed_abs, tag = 'smem constant byte address 0x4 - core index']
  #allocation1 [shape = 'u32[144,128]{1,0:T(1,128)}', space=vmem, size = 0x12000, scoped, tag = 'internal scratch']
  #allocation2 [shape = 'f32[16,128]{1,0:T(8,128)}', space=vmem, size = 0x2000, scoped, tag = 'scratch operand']
  #allocation3 [shape = 'f32[1]{0:T(128)S(6)}', space=smem, size = 0x200, scoped, tag = 'scoped memory for tpu_custom_call.1']
  %s0 = inlined_call_operand.<no memory space> [shape: f32[1], index: 0, kind: input, shape index: {}]
  %s1 = inlined_call_operand.hbm [shape: f32[16,128], index: 1, kind: input, shape index: {}]
  %s2 = inlined_call_operand.hbm [shape: f32[16,128], index: 2, kind: input, shape index: {}]
  %s3 = inlined_call_operand.hbm [shape: f32[16,128], index: 3, kind: input, shape index: {}]
  %s4 = inlined_call_operand.hbm [shape: f32[16,128], index: 4, kind: input, shape index: {}]
  %s5 = inlined_call_operand.hbm [shape: f32[8,128], index: 5, kind: output, shape index: {}]
  %s6 = sld [smem:[#allocation0]]
  $region70: #{tpu_custom_call.1} parent=0
    _
  %s8 = ssub.s32 1, %s6
  %s9 = scalar_select 0, %s8, %s6
  %10 = sst [smem:[#allocation3]] %s0
  $region1: #{tpu_custom_call.1} parent=0
    #allocation4 [shape = 'u8[8192]{0}', space=vmem, size = 0x2000, scoped, tag = 'input window, operand 1, single buffered']
    #allocation5 [shape = 's32[1]{0}', space=sflag, size = 0x4, scoped, tag = 'scoped memory for tpu_custom_call.1']
    #allocation6 [shape = 's32[1]{0}', space=sflag, size = 0x4, scoped, tag = 'scoped memory for tpu_custom_call.1']
    #allocation7 [shape = 'u8[8192]{0}', space=vmem, size = 0x2000, scoped, tag = 'input window, operand 2, single buffered']
    #allocation8 [shape = 's32[1]{0}', space=sflag, size = 0x4, scoped, tag = 'scoped memory for tpu_custom_call.1']
    #allocation9 [shape = 'u8[8192]{0}', space=vmem, size = 0x2000, scoped, tag = 'input window, operand 3, single buffered']
    #allocation10 [shape = 'u8[8192]{0}', space=vmem, size = 0x2000, scoped, tag = 'input window, operand 4, single buffered']
    #allocation11 [shape = 's32[1]{0}', space=sflag, size = 0x4, scoped, tag = 'scoped memory for tpu_custom_call.1']
    #allocation12 [shape = 'u8[4096]{0}', space=vmem, size = 0x1000, scoped, tag = 'output window, operand 0, single buffered']
    %11 = vsyncpa [#allocation5], 0
    %12 = vsyncpa [#allocation8], 0
    %13 = vsyncpa [#allocation11], 0
    %14 = vsyncpa [#allocation6], 0
    // Predicated region
    $region2: #{tpu_custom_call.1} parent=1 // pred_check
      _
    $region3: #{tpu_custom_call.1} parent=1 // pred_check_branch
      %16 = sbr.rel (0) target = $region5
    $region4: #{tpu_custom_call.1} parent=1 // pred_region
      _
    $region5: #{tpu_custom_call.1} parent=1 // pred_fallthru
      _
    // Predicated region
    $region6: #{tpu_custom_call.1} parent=1 // pred_check
      _
    $region7: #{tpu_custom_call.1} parent=1 // pred_check_branch
      %18 = sbr.rel (0) target = $region9
    $region8: #{tpu_custom_call.1} parent=1 // pred_region
      %s19 = sadd.s32 0, 0
      %p20 = scmp.lt.s32.totalorder %s19, 0
      %s21 = scalar_select %p20, %s19, 0
      %s22 = smul.u32 2, %s21
      %s24 = ssub.s32 256, 256
      %25 = vsyncadd [#allocation5], %s24
      %s26 = smul.addr %s22, 128
      %s27 = scalar_lea.hbm %s1, %s26
      %s28 = sshll.u32 [#allocation4], 4
      %s29 = int_to_ptr.vmem [resolvable:$true] %s28
      %34 = dma.hbm_to_vmem [thread:$0]  %s27, 256, %s29, [#allocation5], 128, 128, 8
    $region9: #{tpu_custom_call.1} parent=1 // pred_fallthru
      _
    // Predicated region
    $region10: #{tpu_custom_call.1} parent=1 // pred_check
      _
    $region11: #{tpu_custom_call.1} parent=1 // pred_check_branch
      %36 = sbr.rel (0) target = $region13
    $region12: #{tpu_custom_call.1} parent=1 // pred_region
      %s37 = sadd.s32 0, 0
      %p38 = scmp.lt.s32.totalorder %s37, 0
      %s39 = scalar_select %p38, %s37, 0
      %s40 = smul.u32 2, %s39
      %s42 = ssub.s32 256, 256
      %43 = vsyncadd [#allocation8], %s42
      %s44 = smul.addr %s40, 128
      %s45 = scalar_lea.hbm %s2, %s44
      %s46 = sshll.u32 [#allocation7], 4
      %s47 = int_to_ptr.vmem [resolvable:$true] %s46
      %52 = dma.hbm_to_vmem [thread:$0]  %s45, 256, %s47, [#allocation8], 128, 128, 8
    $region13: #{tpu_custom_call.1} parent=1 // pred_fallthru
      _
    // Predicated region
    $region14: #{tpu_custom_call.1} parent=1 // pred_check
      _
    $region15: #{tpu_custom_call.1} parent=1 // pred_check_branch
      %54 = sbr.rel (0) target = $region17
    $region16: #{tpu_custom_call.1} parent=1 // pred_region
      %s55 = sadd.s32 0, 0
      %p56 = scmp.lt.s32.totalorder %s55, 0
      %s57 = scalar_select %p56, %s55, 0
      %s58 = smul.u32 2, %s57
      %s60 = ssub.s32 256, 256
      %61 = vsyncadd [#allocation8], %s60
      %s62 = smul.addr %s58, 128
      %s63 = scalar_lea.hbm %s3, %s62
      %s64 = sshll.u32 [#allocation9], 4
      %s65 = int_to_ptr.vmem [resolvable:$true] %s64
      %70 = dma.hbm_to_vmem [thread:$0]  %s63, 256, %s65, [#allocation8], 128, 128, 8
    $region17: #{tpu_custom_call.1} parent=1 // pred_fallthru
      _
    // Predicated region
    $region18: #{tpu_custom_call.1} parent=1 // pred_check
      _
    $region19: #{tpu_custom_call.1} parent=1 // pred_check_branch
      %72 = sbr.rel (0) target = $region21
    $region20: #{tpu_custom_call.1} parent=1 // pred_region
      %s73 = sadd.s32 0, 0
      %p74 = scmp.lt.s32.totalorder %s73, 0
      %s75 = scalar_select %p74, %s73, 0
      %s76 = smul.u32 2, %s75
      %s78 = ssub.s32 256, 256
      %79 = vsyncadd [#allocation11], %s78
      %s80 = smul.addr %s76, 128
      %s81 = scalar_lea.hbm %s4, %s80
      %s82 = sshll.u32 [#allocation10], 4
      %s83 = int_to_ptr.vmem [resolvable:$true] %s82
      %88 = dma.hbm_to_vmem [thread:$0]  %s81, 256, %s83, [#allocation11], 128, 128, 8
    $region21: #{tpu_custom_call.1} parent=1 // pred_fallthru
      _
    // Predicated region
    $region22: #{tpu_custom_call.1} parent=1 // pred_check
      _
    $region23: #{tpu_custom_call.1} parent=1 // pred_check_branch
      %90 = sbr.rel (0) target = $region25
    $region24: #{tpu_custom_call.1} parent=1 // pred_region
      %91 = dma.done [#allocation5], 256
    $region25: #{tpu_custom_call.1} parent=1 // pred_fallthru
      _
    // Predicated region
    $region26: #{tpu_custom_call.1} parent=1 // pred_check
      _
    $region27: #{tpu_custom_call.1} parent=1 // pred_check_branch
      %93 = sbr.rel (0) target = $region29
    $region28: #{tpu_custom_call.1} parent=1 // pred_region
      %94 = dma.done [#allocation8], 256
    $region29: #{tpu_custom_call.1} parent=1 // pred_fallthru
      _
    // Predicated region
    $region30: #{tpu_custom_call.1} parent=1 // pred_check
      _
    $region31: #{tpu_custom_call.1} parent=1 // pred_check_branch
      %96 = sbr.rel (0) target = $region33
    $region32: #{tpu_custom_call.1} parent=1 // pred_region
      %97 = dma.done [#allocation8], 256
    $region33: #{tpu_custom_call.1} parent=1 // pred_fallthru
      _
    // Predicated region
    $region34: #{tpu_custom_call.1} parent=1 // pred_check
      _
    $region35: #{tpu_custom_call.1} parent=1 // pred_check_branch
      %99 = sbr.rel (0) target = $region37
    $region36: #{tpu_custom_call.1} parent=1 // pred_region
      %100 = dma.done [#allocation11], 256
    $region37: #{tpu_custom_call.1} parent=1 // pred_fallthru
      _
    %s101 = sadd.s32 0, 0
    %p102 = scmp.lt.s32.totalorder %s101, 0
    %s103 = scalar_select %p102, %s101, 0
    %s104 = smul.u32 2, %s103
    %s105 = sadd.s32 0, 0
    %p106 = scmp.lt.s32.totalorder %s105, 0
    %s107 = scalar_select %p106, %s105, 0
    %s108 = smul.u32 2, %s107
    %s109 = sadd.s32 0, 0
    %p110 = scmp.lt.s32.totalorder %s109, 0
    %s111 = scalar_select %p110, %s109, 0
    %s112 = smul.u32 2, %s111
    %s113 = sadd.s32 0, 0
    %p114 = scmp.lt.s32.totalorder %s113, 0
    %s115 = scalar_select %p114, %s113, 0
    %s116 = smul.u32 2, %s115
    %s117 = sadd.s32 0, 0
    %p118 = scmp.eq.s32.totalorder 0, 0
    // Predicated region
    $region38: #{tpu_custom_call.1} parent=1 // pred_check
      %p119 = pneg %p118
    $region39: #{tpu_custom_call.1} parent=1 // pred_check_branch
      %121 = sbr.rel (%p119) target = $region41
    $region40: #{tpu_custom_call.1} parent=1 // pred_region
      %122 = vst [vmem:[#allocation2] sm:$0xff] 0.0
      %123 = vst [vmem:[#allocation2 + $0x8] sm:$0xff] 0.0
    $region41: #{tpu_custom_call.1} parent=1 // pred_fallthru
      _
    %p124 = scmp.lt.s32.totalorder %s117, 0
    // Predicated region
    $region42: #{tpu_custom_call.1} parent=1 // pred_check
      %p125 = pneg %p124
    $region43: #{tpu_custom_call.1} parent=1 // pred_check_branch
      %127 = sbr.rel (%p125) target = $region45
    $region44: #{tpu_custom_call.1} parent=1 // pred_region
      %v128 = vld [vmem:[#allocation2] sm:$0xff]
      %v129 = vld [vmem:[#allocation2 + $0x8] sm:$0xff]
      %v130 = vld [vmem:[#allocation4] sm:$0xff]
      %v131 = vld [vmem:[#allocation4 + $0x8] sm:$0xff]
      %v132 = vld [vmem:[#allocation7] sm:$0xff]
      %v133 = vld [vmem:[#allocation7 + $0x8] sm:$0xff]
      %v134 = vmul.f32 %v130, %v132
      %v135 = vmul.f32 %v131, %v133
      %v136 = vadd.f32 %v128, %v134
      %v137 = vadd.f32 %v129, %v135
      %138 = vst [vmem:[#allocation2] sm:$0xff] %v136
      %139 = vst [vmem:[#allocation2 + $0x8] sm:$0xff] %v137
    $region45: #{tpu_custom_call.1} parent=1 // pred_fallthru
      _
    %p140 = scmp.eq.s32.totalorder %s117, 0
    // Predicated region
    $region46: #{tpu_custom_call.1} parent=1 // pred_check
      %p141 = pneg %p140
    $region47: #{tpu_custom_call.1} parent=1 // pred_check_branch
      %143 = sbr.rel (%p141) target = $region49
    $region48: #{tpu_custom_call.1} parent=1 // pred_region
      %s144 = smul.u32 %s117, 16
      %v145 = vlaneseq
      %v146 = vshrl.u32 %v145, 7
      %v147 = vadd.s32 %v146, 8
      %v148 = vstv %s144
      %v149 = vadd.s32 %v148, %v146
      %v150 = vadd.s32 %v148, %v147
      %v151 = vld [vmem:[#allocation4] sm:$0xff]
      %v152 = vld [vmem:[#allocation4 + $0x8] sm:$0xff]
      %v153 = vld [vmem:[#allocation7] sm:$0xff]
      %v154 = vld [vmem:[#allocation7 + $0x8] sm:$0xff]
      %v155 = vmul.f32 %v151, %v153
      %v156 = vmul.f32 %v152, %v154
      %v157 = vld [vmem:[#allocation2] sm:$0xff]
      %v158 = vld [vmem:[#allocation2 + $0x8] sm:$0xff]
      %vm159 = vcmp.lt.s32.totalorder %v149, 16
      %vm160 = vcmp.lt.s32.totalorder %v150, 16
      %v161 = vsel %vm159, %v155, 0.0
      %v162 = vsel %vm160, %v156, 0.0
      %v163 = vadd.f32 %v157, %v161
      %v164 = vadd.f32 %v158, %v162
      %165 = vst [vmem:[#allocation2] sm:$0xff] %v163
      %166 = vst [vmem:[#allocation2 + $0x8] sm:$0xff] %v164
    $region49: #{tpu_custom_call.1} parent=1 // pred_fallthru
      _
    %s167 = sld [smem:[#allocation3]]
    // Predicated region
    $region50: #{tpu_custom_call.1} parent=1 // pred_check
      %p168 = pneg %p124
    $region51: #{tpu_custom_call.1} parent=1 // pred_check_branch
      %170 = sbr.rel (%p168) target = $region53
    $region52: #{tpu_custom_call.1} parent=1 // pred_region
      %v171 = vld [vmem:[#allocation2] sm:$0xff]
      %v172 = vld [vmem:[#allocation2 + $0x8] sm:$0xff]
      %v173 = vld [vmem:[#allocation9] sm:$0xff]
      %v174 = vld [vmem:[#allocation9 + $0x8] sm:$0xff]
      %v175 = vld [vmem:[#allocation10] sm:$0xff]
      %v176 = vld [vmem:[#allocation10 + $0x8] sm:$0xff]
      %v177 = vmul.f32 %v173, %v175
      %v178 = vmul.f32 %v174, %v176
      %v179 = vstv %s167
      %v180 = vmul.f32 %v179, %v177
      %v181 = vmul.f32 %v179, %v178
      %v182 = vadd.f32 %v171, %v180
      %v183 = vadd.f32 %v172, %v181
      %184 = vst [vmem:[#allocation2] sm:$0xff] %v182
      %185 = vst [vmem:[#allocation2 + $0x8] sm:$0xff] %v183
    $region53: #{tpu_custom_call.1} parent=1 // pred_fallthru
      _
    // Predicated region
    $region54: #{tpu_custom_call.1} parent=1 // pred_check
      %p186 = pneg %p140
    $region55: #{tpu_custom_call.1} parent=1 // pred_check_branch
      %188 = sbr.rel (%p186) target = $region57
    $region56: #{tpu_custom_call.1} parent=1 // pred_region
      %s189 = smul.u32 %s117, 16
      %v190 = vlaneseq
      %v191 = vshrl.u32 %v190, 7
      %v192 = vadd.s32 %v191, 8
      %v193 = vstv %s189
      %v194 = vadd.s32 %v193, %v191
      %v195 = vadd.s32 %v193, %v192
      %v196 = vld [vmem:[#allocation9] sm:$0xff]
      %v197 = vld [vmem:[#allocation9 + $0x8] sm:$0xff]
      %v198 = vld [vmem:[#allocation10] sm:$0xff]
      %v199 = vld [vmem:[#allocation10 + $0x8] sm:$0xff]
      %v200 = vmul.f32 %v196, %v198
      %v201 = vmul.f32 %v197, %v199
      %v202 = vld [vmem:[#allocation2] sm:$0xff]
      %v203 = vld [vmem:[#allocation2 + $0x8] sm:$0xff]
      %vm204 = vcmp.lt.s32.totalorder %v194, 16
      %vm205 = vcmp.lt.s32.totalorder %v195, 16
      %v206 = vsel %vm204, %v200, 0.0
      %v207 = vsel %vm205, %v201, 0.0
      %v208 = vstv %s167
      %v209 = vmul.f32 %v208, %v206
      %v210 = vmul.f32 %v208, %v207
      %v211 = vadd.f32 %v202, %v209
      %v212 = vadd.f32 %v203, %v210
      %213 = vst [vmem:[#allocation2] sm:$0xff] %v211
      %214 = vst [vmem:[#allocation2 + $0x8] sm:$0xff] %v212
    $region57: #{tpu_custom_call.1} parent=1 // pred_fallthru
      _
    // Predicated region
    $region58: #{tpu_custom_call.1} parent=1 // pred_check
      %p215 = pneg %p118
    $region59: #{tpu_custom_call.1} parent=1 // pred_check_branch
      %217 = sbr.rel (%p215) target = $region61
    $region60: #{tpu_custom_call.1} parent=1 // pred_region
      %v218 = vld [vmem:[#allocation2] sm:$0xff]
      %v219 = vld [vmem:[#allocation2 + $0x8] sm:$0xff]
      %v220 = vadd.f32 %v218, %v219
      %221 = vst [vmem:[#allocation12] sm:$0xff] %v220
    $region61: #{tpu_custom_call.1} parent=1 // pred_fallthru
      _
    // Predicated region
    $region62: #{tpu_custom_call.1} parent=1 // pred_check
      _
    $region63: #{tpu_custom_call.1} parent=1 // pred_check_branch
      %223 = sbr.rel (0) target = $region65
    $region64: #{tpu_custom_call.1} parent=1 // pred_region
      %s225 = ssub.s32 128, 128
      %226 = vsyncadd [#allocation6], %s225
      %s228 = sshll.u32 [#allocation12], 4
      %s229 = int_to_ptr.vmem [resolvable:$true] %s228
      %231 = dma.vmem_to_hbm [thread:$0]  %s229, 128, %s5, [#allocation6]
    $region65: #{tpu_custom_call.1} parent=1 // pred_fallthru
      _
    // Predicated region
    $region66: #{tpu_custom_call.1} parent=1 // pred_check
      _
    $region67: #{tpu_custom_call.1} parent=1 // pred_check_branch
      %233 = sbr.rel (0) target = $region69
    $region68: #{tpu_custom_call.1} parent=1 // pred_region
      %234 = dma.done [#allocation6], 128
    $region69: #{tpu_custom_call.1} parent=1 // pred_fallthru
      _
    %235 = vsyncpa [#allocation5], 1
    %236 = vsyncpa [#allocation8], 1
    %237 = vsyncpa [#allocation11], 1
    %238 = vsyncpa [#allocation6], 1

</llo_original>
